<compile_context>
chip_gen: v5e
topology: v5e:2x2
jax: 0.10.0
libtpu: 0.0.40
codegen_flags: <defaults>
</compile_context>

<pallas_src>
import jax
import jax.numpy as jnp
from jax import lax
from jax.experimental import pallas as pl
from jax.experimental.pallas import tpu as pltpu


def _row_tile(n, preferred=(256, 128, 64, 32, 16, 8)):
    """Largest MXU-friendly row tile dividing n (256 targets v6e/v7x MXU rows)."""
    for t in preferred:
        if n % t == 0:
            return t
    return n


def _vmem_limit_bytes(frac=0.75, fallback=48 * 1024 * 1024):
    """Scoped-VMEM budget from the real device capacity, with headroom."""
    try:
        cap = getattr(pltpu.get_tpu_info(), "vmem_capacity_bytes", None)
        if cap:
            return int(cap * frac)
    except Exception:
        pass
    return fallback


# -----------------------------------------------------------------------------
# Kernel 1: fused embedding lookup + masked mean pooling + pooler dense + tanh.
#
#   grid = (N // TN,)   all axes independent -> "parallel"
#   ids   : (TN, S)  int32  VMEM tile
#   mask  : (TN, S)  f32    VMEM tile
#   emb   : (V, H)   bf16   VMEM resident (constant index_map)
#   W     : (H, H)   bf16   VMEM resident
#   b     : (1, H)   f32    VMEM resident
#   out   : (TN, H)  f32    VMEM tile
# -----------------------------------------------------------------------------
def _encoder_pooler_kernel(ids_ref, mask_ref, emb_ref, w_ref, b_ref, out_ref):
    tn, seq = mask_ref.shape
    v = emb_ref.shape[0]

    ids = ids_ref[...]                                        # (TN, S) int32
    mask = mask_ref[...]                                      # (TN, S) f32
    den = jnp.maximum(jnp.sum(mask, axis=1, keepdims=True), 1.0)
    scale = mask / den                                        # exact f32 divide

    # Scaled one-hot token counts: counts[n, v] = sum_s scale[n, s] * (ids[n, s] == v).
    # Built with a short statically-unrolled loop of 2-D VALU ops (seq is small);
    # the heavy contraction over V then runs on the MXU below.
    # TODO(synk): for large vocabularies (V*H exceeding the VMEM budget), switch
    # to per-tile token dedup + a few large bf16 row DMAs instead of a resident table.
    vocab_iota = lax.broadcasted_iota(jnp.int32, (1, v), 1)   # (1, V)
    counts = jnp.zeros((tn, v), jnp.float32)
    for s in range(seq):
        counts = counts + jnp.where(ids[:, s:s + 1] == vocab_iota,
                                    scale[:, s:s + 1], 0.0)

    # Masked mean pool == counts @ table: bf16 MXU operands, f32 accumulation.
    pooled = jnp.dot(counts.astype(jnp.bfloat16), emb_ref[...],
                     preferred_element_type=jnp.float32)      # (TN, H) f32

    # Pooler dense + tanh.
    logits = jnp.dot(pooled.astype(jnp.bfloat16), w_ref[...],
                     preferred_element_type=jnp.float32) + b_ref[...]
    out_ref[...] = jnp.tanh(logits).astype(out_ref.dtype)


def encoder_pooler(ids, mask, emb_table, w, b, *, row_tile=None):
    n, seq = ids.shape
    v, h = emb_table.shape
    tn = row_tile or _row_tile(n)
    assert n % tn == 0, (n, tn)

    return pl.pallas_call(
        _encoder_pooler_kernel,
        out_shape=jax.ShapeDtypeStruct((n, h), jnp.float32),
        grid=(n // tn,),
        in_specs=[
            pl.BlockSpec((tn, seq), lambda i: (i, 0)),    # ids tile
            pl.BlockSpec((tn, seq), lambda i: (i, 0)),    # mask tile
            pl.BlockSpec((v, h), lambda i: (0, 0)),       # emb table (resident, bf16)
            pl.BlockSpec((h, h), lambda i: (0, 0)),       # W (resident, bf16)
            pl.BlockSpec((1, h), lambda i: (0, 0)),       # bias (resident)
        ],
        out_specs=pl.BlockSpec((tn, h), lambda i: (i, 0)),
        compiler_params=pltpu.CompilerParams(
            dimension_semantics=("parallel",),
            vmem_limit_bytes=_vmem_limit_bytes(),
        ),
    )(ids.astype(jnp.int32), mask.astype(jnp.float32),
      emb_table.astype(jnp.bfloat16), w.astype(jnp.bfloat16),
      b.astype(jnp.float32))


# -----------------------------------------------------------------------------
# Kernel 2: similarities + per-row softmax cross-entropy vs labels arange(N).
#
#   grid = (N // TQ,)   fully parallel (per-row partial losses, summed in XLA)
#   p     : (TQ, H)  bf16  query tile
#   vall  : (M, H)   bf16  all candidate rows, resident across the grid
#   out   : (TQ, 1)  f32   per-row (logsumexp - diag) loss
# -----------------------------------------------------------------------------
def _contrastive_rowloss_kernel(p_ref, vall_ref, out_ref):
    tq, _ = p_ref.shape
    row0 = pl.multiple_of(pl.program_id(0) * tq, tq)

    p = p_ref[...]                                            # (TQ, H) bf16
    # sims[i, j] = <p_i, v_j>; bf16 MXU operands, f32 accumulation.
    sims = lax.dot_general(p, vall_ref[...], (((1,), (1,)), ((), ())),
                           preferred_element_type=jnp.float32)   # (TQ, M)

    m = jnp.max(sims, axis=1, keepdims=True)
    lse = m + jnp.log(jnp.sum(jnp.exp(sims - m), axis=1, keepdims=True))  # (TQ, 1)

    # Label (diagonal) logits: slice the matching rows out of the resident
    # candidate block (no extra input stream), computed with the same
    # bf16-operand / f32-accumulate precision as the MXU sims.
    vdiag = vall_ref[pl.ds(row0, tq), :]                      # (TQ, H) bf16
    diag = jnp.sum(p.astype(jnp.float32) * vdiag.astype(jnp.float32),
                   axis=1, keepdims=True)                     # (TQ, 1)

    out_ref[...] = lse - diag


def contrastive_row_losses(queries_bf16, candidates_bf16, *, row_tile=None):
    n, h = queries_bf16.shape
    m, _ = candidates_bf16.shape
    assert m >= n, (m, n)
    tq = row_tile or _row_tile(n)
    assert n % tq == 0, (n, tq)

    # TODO(synk): for very large M, also tile the candidate axis with an online
    # softmax (m_i / l_i accumulators) so sims never needs (TQ, M) VMEM at once.
    return pl.pallas_call(
        _contrastive_rowloss_kernel,
        out_shape=jax.ShapeDtypeStruct((n, 1), jnp.float32),
        grid=(n // tq,),
        in_specs=[
            pl.BlockSpec((tq, h), lambda i: (i, 0)),   # query tile (bf16)
            pl.BlockSpec((m, h), lambda i: (0, 0)),    # all candidates (resident bf16)
        ],
        out_specs=pl.BlockSpec((tq, 1), lambda i: (i, 0)),
        compiler_params=pltpu.CompilerParams(
            dimension_semantics=("parallel",),
            vmem_limit_bytes=_vmem_limit_bytes(),
        ),
    )(queries_bf16, candidates_bf16)


# -----------------------------------------------------------------------------
# PrefixSuffixModel.forward (negative_examples == 'none' path)
# -----------------------------------------------------------------------------
def prefix_suffix_forward(batch, params, *, row_tile=None):
    prefices = batch["prefices"]        # (B, P, Sp) int32
    suffices = batch["suffices"]        # (B, P, Ss) int32
    b, p, sp = prefices.shape
    _, _, ss = suffices.shape
    n = b * p

    prefix_outs = encoder_pooler(prefices.reshape(n, sp),
                                 batch["prefix_masks"].reshape(n, sp),
                                 params["prefix_emb"], params["prefix_w"],
                                 params["prefix_b"], row_tile=row_tile)
    suffix_outs = encoder_pooler(suffices.reshape(n, ss),
                                 batch["suffix_masks"].reshape(n, ss),
                                 params["suffix_emb"], params["suffix_w"],
                                 params["suffix_b"], row_tile=row_tile)

    # TODO(synk): 'prefix' / 'negatives' negative-example branches would run the
    # suffix encoder on extra inputs and concat onto the candidate matrix here
    # (the loss kernel already supports M >= N candidate rows).
    positive_negative_vectors = suffix_outs

    # Cast to bf16 once in the wrapper; the loss kernel never recasts per step.
    per_row = contrastive_row_losses(
        prefix_outs.astype(jnp.bfloat16),
        positive_negative_vectors.astype(jnp.bfloat16),
        row_tile=row_tile)
    loss = jnp.mean(per_row)
    return {"lm": loss}, (prefix_outs, suffix_outs)


# -----------------------------------------------------------------------------
# Pure-JAX f32 reference for verification.
# -----------------------------------------------------------------------------
def reference_forward(batch, params):
    prefices = batch["prefices"]
    suffices = batch["suffices"]
    pm = batch["prefix_masks"].astype(jnp.float32)
    sm = batch["suffix_masks"].astype(jnp.float32)
    b, p, sp = prefices.shape
    _, _, ss = suffices.shape
    n = b * p

    def enc(ids, mask, tbl, w, bias):
        e = jnp.take(tbl, ids, axis=0)
        pooled = jnp.sum(e * mask[:, :, None], axis=1) / jnp.sum(
            mask, axis=1, keepdims=True)
        return jnp.tanh(pooled @ w + bias)

    po = enc(prefices.reshape(n, sp), pm.reshape(n, sp),
             params["prefix_emb"], params["prefix_w"], params["prefix_b"])
    so = enc(suffices.reshape(n, ss), sm.reshape(n, ss),
             params["suffix_emb"], params["suffix_w"], params["suffix_b"])
    sims = po @ so.T
    logp = jax.nn.log_softmax(sims, axis=1)
    loss = -jnp.mean(logp[jnp.arange(n), jnp.arange(n)])
    return loss, po, so


if __name__ == "__main__":
    BATCH, NUM_PAIRS = 2, 8            # N = 16 rows
    SEQ = 8
    VOCAB, HIDDEN = 64, 128
    ROW_TILE = 8                       # toy-only: forces 2-step grids in both kernels

    key = jax.random.PRNGKey(0)
    (k_pe, k_se, k_pw, k_pb, k_sw, k_sb,
     k_pid, k_sid, k_plen, k_slen) = jax.random.split(key, 10)

    params = {
        "prefix_emb": jax.random.normal(k_pe, (VOCAB, HIDDEN), jnp.float32) * 0.1,
        "suffix_emb": jax.random.normal(k_se, (VOCAB, HIDDEN), jnp.float32) * 0.1,
        "prefix_w": jax.random.normal(k_pw, (HIDDEN, HIDDEN), jnp.float32) * 0.05,
        "prefix_b": jax.random.normal(k_pb, (1, HIDDEN), jnp.float32) * 0.05,
        "suffix_w": jax.random.normal(k_sw, (HIDDEN, HIDDEN), jnp.float32) * 0.05,
        "suffix_b": jax.random.normal(k_sb, (1, HIDDEN), jnp.float32) * 0.05,
    }

    prefices = jax.random.randint(k_pid, (BATCH, NUM_PAIRS, SEQ), 0, VOCAB,
                                  dtype=jnp.int32)
    suffices = jax.random.randint(k_sid, (BATCH, NUM_PAIRS, SEQ), 0, VOCAB,
                                  dtype=jnp.int32)
    # Attention masks with variable (>= 3 token) lengths per sequence.
    plen = jax.random.randint(k_plen, (BATCH, NUM_PAIRS, 1), 3, SEQ + 1)
    slen = jax.random.randint(k_slen, (BATCH, NUM_PAIRS, 1), 3, SEQ + 1)
    pos = jnp.arange(SEQ)[None, None, :]
    prefix_masks = (pos < plen).astype(jnp.int32)
    suffix_masks = (pos < slen).astype(jnp.int32)

    batch = {
        "prefices": prefices,
        "suffices": suffices,
        "prefix_masks": prefix_masks,
        "suffix_masks": suffix_masks,
    }

    loss_dict, (po, so) = prefix_suffix_forward(batch, params, row_tile=ROW_TILE)
    loss = jax.block_until_ready(loss_dict["lm"])

    ref_loss, ref_po, ref_so = reference_forward(batch, params)
    ref_loss = jax.block_until_ready(ref_loss)

    # bf16 MXU operands (f32 accumulation) -> loosen tolerance vs f32 reference.
    assert jnp.allclose(po, ref_po, atol=1e-2, rtol=1e-2), "prefix pooler mismatch"
    assert jnp.allclose(so, ref_so, atol=1e-2, rtol=1e-2), "suffix pooler mismatch"
    assert jnp.allclose(loss, ref_loss, atol=3e-2, rtol=3e-2), (loss, ref_loss)

    print("KERNEL_OK")
</pallas_src>

<mosaic_0001>
module attributes {stable_mosaic.version = 11 : i64} {
  func.func @_encoder_pooler_kernel(%arg0: i32, %arg1: memref<8x8xi32, #tpu.memory_space<vmem>>, %arg2: memref<8x8xf32, #tpu.memory_space<vmem>>, %arg3: memref<64x128xbf16, #tpu.memory_space<vmem>>, %arg4: memref<128x128xbf16, #tpu.memory_space<vmem>>, %arg5: memref<1x128xf32, #tpu.memory_space<vmem>>, %arg6: memref<8x128xf32, #tpu.memory_space<vmem>>) attributes {dimension_semantics = [#tpu.dimension_semantics<parallel>], iteration_bounds = array<i64: 2>, scalar_prefetch = 0 : i64, scratch_operands = 0 : i64, tpu.core_type = #tpu.core_type<tc>, window_params = [{transform_indices = @transform_0, window_bounds = array<i64: 8, 8>}, {transform_indices = @transform_1, window_bounds = array<i64: 8, 8>}, {pipeline_mode = #tpu.pipeline_mode<synchronous>, transform_indices = @transform_2, window_bounds = array<i64: 64, 128>}, {pipeline_mode = #tpu.pipeline_mode<synchronous>, transform_indices = @transform_3, window_bounds = array<i64: 128, 128>}, {pipeline_mode = #tpu.pipeline_mode<synchronous>, transform_indices = @transform_4, window_bounds = array<i64: 1, 128>}, {transform_indices = @transform_5, window_bounds = array<i64: 8, 128>}]} {
    %c0 = arith.constant 0 : index
    %c0_0 = arith.constant 0 : index
    %0 = vector.load %arg1[%c0, %c0_0] : memref<8x8xi32, #tpu.memory_space<vmem>>, vector<8x8xi32>
    %c0_1 = arith.constant 0 : index
    %c0_2 = arith.constant 0 : index
    %1 = vector.load %arg2[%c0_1, %c0_2] : memref<8x8xf32, #tpu.memory_space<vmem>>, vector<8x8xf32>
    %cst = arith.constant dense<0.000000e+00> : vector<8xf32>
    %2 = vector.multi_reduction <add>, %1, %cst [1] : vector<8x8xf32> to vector<8xf32>
    %3 = vector.shape_cast %2 : vector<8xf32> to vector<8x1xf32>
    %cst_3 = arith.constant 1.000000e+00 : f32
    %4 = vector.broadcast %cst_3 : f32 to vector<8x1xf32>
    %5 = arith.maximumf %3, %4 : vector<8x1xf32>
    %6 = vector.broadcast %5 : vector<8x1xf32> to vector<8x8xf32>
    %7 = arith.divf %1, %6 : vector<8x8xf32>
    %8 = tpu.iota {dimensions = array<i32: 1>} : vector<1x64xi32>
    %cst_4 = arith.constant 0.000000e+00 : f32
    %9 = vector.broadcast %cst_4 : f32 to vector<8x64xf32>
    %10 = vector.extract_strided_slice %0 {offsets = [0, 0], sizes = [8, 1], strides = [1, 1]} : vector<8x8xi32> to vector<8x1xi32>
    %11 = vector.broadcast %10 : vector<8x1xi32> to vector<8x64xi32>
    %12 = vector.broadcast %8 : vector<1x64xi32> to vector<8x64xi32>
    %13 = arith.cmpi eq, %11, %12 : vector<8x64xi32>
    %14 = vector.extract_strided_slice %7 {offsets = [0, 0], sizes = [8, 1], strides = [1, 1]} : vector<8x8xf32> to vector<8x1xf32>
    %cst_5 = arith.constant 0.000000e+00 : f32
    %15 = vector.shape_cast %14 : vector<8x1xf32> to vector<8x1xf32>
    %16 = vector.broadcast %15 : vector<8x1xf32> to vector<8x64xf32>
    %17 = vector.broadcast %cst_5 : f32 to vector<8x64xf32>
    %18 = arith.select %13, %16, %17 : vector<8x64xi1>, vector<8x64xf32>
    %19 = arith.addf %9, %18 : vector<8x64xf32>
    %20 = vector.extract_strided_slice %0 {offsets = [0, 1], sizes = [8, 1], strides = [1, 1]} : vector<8x8xi32> to vector<8x1xi32>
    %21 = vector.broadcast %20 : vector<8x1xi32> to vector<8x64xi32>
    %22 = vector.broadcast %8 : vector<1x64xi32> to vector<8x64xi32>
    %23 = arith.cmpi eq, %21, %22 : vector<8x64xi32>
    %24 = vector.extract_strided_slice %7 {offsets = [0, 1], sizes = [8, 1], strides = [1, 1]} : vector<8x8xf32> to vector<8x1xf32>
    %cst_6 = arith.constant 0.000000e+00 : f32
    %25 = vector.shape_cast %24 : vector<8x1xf32> to vector<8x1xf32>
    %26 = vector.broadcast %25 : vector<8x1xf32> to vector<8x64xf32>
    %27 = vector.broadcast %cst_6 : f32 to vector<8x64xf32>
    %28 = arith.select %23, %26, %27 : vector<8x64xi1>, vector<8x64xf32>
    %29 = arith.addf %19, %28 : vector<8x64xf32>
    %30 = vector.extract_strided_slice %0 {offsets = [0, 2], sizes = [8, 1], strides = [1, 1]} : vector<8x8xi32> to vector<8x1xi32>
    %31 = vector.broadcast %30 : vector<8x1xi32> to vector<8x64xi32>
    %32 = vector.broadcast %8 : vector<1x64xi32> to vector<8x64xi32>
    %33 = arith.cmpi eq, %31, %32 : vector<8x64xi32>
    %34 = vector.extract_strided_slice %7 {offsets = [0, 2], sizes = [8, 1], strides = [1, 1]} : vector<8x8xf32> to vector<8x1xf32>
    %cst_7 = arith.constant 0.000000e+00 : f32
    %35 = vector.shape_cast %34 : vector<8x1xf32> to vector<8x1xf32>
    %36 = vector.broadcast %35 : vector<8x1xf32> to vector<8x64xf32>
    %37 = vector.broadcast %cst_7 : f32 to vector<8x64xf32>
    %38 = arith.select %33, %36, %37 : vector<8x64xi1>, vector<8x64xf32>
    %39 = arith.addf %29, %38 : vector<8x64xf32>
    %40 = vector.extract_strided_slice %0 {offsets = [0, 3], sizes = [8, 1], strides = [1, 1]} : vector<8x8xi32> to vector<8x1xi32>
    %41 = vector.broadcast %40 : vector<8x1xi32> to vector<8x64xi32>
    %42 = vector.broadcast %8 : vector<1x64xi32> to vector<8x64xi32>
    %43 = arith.cmpi eq, %41, %42 : vector<8x64xi32>
    %44 = vector.extract_strided_slice %7 {offsets = [0, 3], sizes = [8, 1], strides = [1, 1]} : vector<8x8xf32> to vector<8x1xf32>
    %cst_8 = arith.constant 0.000000e+00 : f32
    %45 = vector.shape_cast %44 : vector<8x1xf32> to vector<8x1xf32>
    %46 = vector.broadcast %45 : vector<8x1xf32> to vector<8x64xf32>
    %47 = vector.broadcast %cst_8 : f32 to vector<8x64xf32>
    %48 = arith.select %43, %46, %47 : vector<8x64xi1>, vector<8x64xf32>
    %49 = arith.addf %39, %48 : vector<8x64xf32>
    %50 = vector.extract_strided_slice %0 {offsets = [0, 4], sizes = [8, 1], strides = [1, 1]} : vector<8x8xi32> to vector<8x1xi32>
    %51 = vector.broadcast %50 : vector<8x1xi32> to vector<8x64xi32>
    %52 = vector.broadcast %8 : vector<1x64xi32> to vector<8x64xi32>
    %53 = arith.cmpi eq, %51, %52 : vector<8x64xi32>
    %54 = vector.extract_strided_slice %7 {offsets = [0, 4], sizes = [8, 1], strides = [1, 1]} : vector<8x8xf32> to vector<8x1xf32>
    %cst_9 = arith.constant 0.000000e+00 : f32
    %55 = vector.shape_cast %54 : vector<8x1xf32> to vector<8x1xf32>
    %56 = vector.broadcast %55 : vector<8x1xf32> to vector<8x64xf32>
    %57 = vector.broadcast %cst_9 : f32 to vector<8x64xf32>
    %58 = arith.select %53, %56, %57 : vector<8x64xi1>, vector<8x64xf32>
    %59 = arith.addf %49, %58 : vector<8x64xf32>
    %60 = vector.extract_strided_slice %0 {offsets = [0, 5], sizes = [8, 1], strides = [1, 1]} : vector<8x8xi32> to vector<8x1xi32>
    %61 = vector.broadcast %60 : vector<8x1xi32> to vector<8x64xi32>
    %62 = vector.broadcast %8 : vector<1x64xi32> to vector<8x64xi32>
    %63 = arith.cmpi eq, %61, %62 : vector<8x64xi32>
    %64 = vector.extract_strided_slice %7 {offsets = [0, 5], sizes = [8, 1], strides = [1, 1]} : vector<8x8xf32> to vector<8x1xf32>
    %cst_10 = arith.constant 0.000000e+00 : f32
    %65 = vector.shape_cast %64 : vector<8x1xf32> to vector<8x1xf32>
    %66 = vector.broadcast %65 : vector<8x1xf32> to vector<8x64xf32>
    %67 = vector.broadcast %cst_10 : f32 to vector<8x64xf32>
    %68 = arith.select %63, %66, %67 : vector<8x64xi1>, vector<8x64xf32>
    %69 = arith.addf %59, %68 : vector<8x64xf32>
    %70 = vector.extract_strided_slice %0 {offsets = [0, 6], sizes = [8, 1], strides = [1, 1]} : vector<8x8xi32> to vector<8x1xi32>
    %71 = vector.broadcast %70 : vector<8x1xi32> to vector<8x64xi32>
    %72 = vector.broadcast %8 : vector<1x64xi32> to vector<8x64xi32>
    %73 = arith.cmpi eq, %71, %72 : vector<8x64xi32>
    %74 = vector.extract_strided_slice %7 {offsets = [0, 6], sizes = [8, 1], strides = [1, 1]} : vector<8x8xf32> to vector<8x1xf32>
    %cst_11 = arith.constant 0.000000e+00 : f32
    %75 = vector.shape_cast %74 : vector<8x1xf32> to vector<8x1xf32>
    %76 = vector.broadcast %75 : vector<8x1xf32> to vector<8x64xf32>
    %77 = vector.broadcast %cst_11 : f32 to vector<8x64xf32>
    %78 = arith.select %73, %76, %77 : vector<8x64xi1>, vector<8x64xf32>
    %79 = arith.addf %69, %78 : vector<8x64xf32>
    %80 = vector.extract_strided_slice %0 {offsets = [0, 7], sizes = [8, 1], strides = [1, 1]} : vector<8x8xi32> to vector<8x1xi32>
    %81 = vector.broadcast %80 : vector<8x1xi32> to vector<8x64xi32>
    %82 = vector.broadcast %8 : vector<1x64xi32> to vector<8x64xi32>
    %83 = arith.cmpi eq, %81, %82 : vector<8x64xi32>
    %84 = vector.extract_strided_slice %7 {offsets = [0, 7], sizes = [8, 1], strides = [1, 1]} : vector<8x8xf32> to vector<8x1xf32>
    %cst_12 = arith.constant 0.000000e+00 : f32
    %85 = vector.shape_cast %84 : vector<8x1xf32> to vector<8x1xf32>
    %86 = vector.broadcast %85 : vector<8x1xf32> to vector<8x64xf32>
    %87 = vector.broadcast %cst_12 : f32 to vector<8x64xf32>
    %88 = arith.select %83, %86, %87 : vector<8x64xi1>, vector<8x64xf32>
    %89 = arith.addf %79, %88 : vector<8x64xf32>
    %90 = arith.truncf %89 : vector<8x64xf32> to vector<8x64xbf16>
    %c0_13 = arith.constant 0 : index
    %c0_14 = arith.constant 0 : index
    %91 = vector.load %arg3[%c0_13, %c0_14] : memref<64x128xbf16, #tpu.memory_space<vmem>>, vector<64x128xbf16>
    %cst_15 = arith.constant dense<0.000000e+00> : vector<8x128xf32>
    %92 = tpu.matmul %90, %91, %cst_15 {dimension_numbers = #tpu.dot_dimension_numbers<[1], [0], [0], [1], [0, 0, 1, 1], [], []>} : vector<8x64xbf16>, vector<64x128xbf16>, vector<8x128xf32> -> vector<8x128xf32>
    %93 = arith.truncf %92 : vector<8x128xf32> to vector<8x128xbf16>
    %c0_16 = arith.constant 0 : index
    %c0_17 = arith.constant 0 : index
    %94 = vector.load %arg4[%c0_16, %c0_17] : memref<128x128xbf16, #tpu.memory_space<vmem>>, vector<128x128xbf16>
    %cst_18 = arith.constant dense<0.000000e+00> : vector<8x128xf32>
    %95 = tpu.matmul %93, %94, %cst_18 {dimension_numbers = #tpu.dot_dimension_numbers<[1], [0], [0], [1], [0, 0, 1, 1], [], []>} : vector<8x128xbf16>, vector<128x128xbf16>, vector<8x128xf32> -> vector<8x128xf32>
    %c0_19 = arith.constant 0 : index
    %c0_20 = arith.constant 0 : index
    %96 = vector.load %arg5[%c0_19, %c0_20] : memref<1x128xf32, #tpu.memory_space<vmem>>, vector<1x128xf32>
    %97 = vector.broadcast %96 : vector<1x128xf32> to vector<8x128xf32>
    %98 = arith.addf %95, %97 : vector<8x128xf32>
    %99 = math.tanh %98 : vector<8x128xf32>
    %c0_21 = arith.constant 0 : index
    %c0_22 = arith.constant 0 : index
    %100 = vector.load %arg6[%c0_21, %c0_22] : memref<8x128xf32, #tpu.memory_space<vmem>>, vector<8x128xf32>
    tpu.vector_store %arg6[%c0_21, %c0_22], %99 {strides = array<i32>} : memref<8x128xf32, #tpu.memory_space<vmem>>, vector<8x128xf32>,
    return
  }
  func.func @transform_0(%arg0: i32) -> (i32, i32) {
    %c0_i32 = arith.constant 0 : i32
    %c0_i32_0 = arith.constant 0 : i32
    return %arg0, %c0_i32 : i32, i32
  }
  func.func @transform_1(%arg0: i32) -> (i32, i32) {
    %c0_i32 = arith.constant 0 : i32
    %c0_i32_0 = arith.constant 0 : i32
    return %arg0, %c0_i32 : i32, i32
  }
  func.func @transform_2(%arg0: i32) -> (i32, i32) {
    %c0_i32 = arith.constant 0 : i32
    %c0_i32_0 = arith.constant 0 : i32
    %c0_i32_1 = arith.constant 0 : i32
    return %c0_i32, %c0_i32_0 : i32, i32
  }
  func.func @transform_3(%arg0: i32) -> (i32, i32) {
    %c0_i32 = arith.constant 0 : i32
    %c0_i32_0 = arith.constant 0 : i32
    %c0_i32_1 = arith.constant 0 : i32
    return %c0_i32, %c0_i32_0 : i32, i32
  }
  func.func @transform_4(%arg0: i32) -> (i32, i32) {
    %c0_i32 = arith.constant 0 : i32
    %c0_i32_0 = arith.constant 0 : i32
    %c0_i32_1 = arith.constant 0 : i32
    return %c0_i32, %c0_i32_0 : i32, i32
  }
  func.func @transform_5(%arg0: i32) -> (i32, i32) {
    %c0_i32 = arith.constant 0 : i32
    %c0_i32_0 = arith.constant 0 : i32
    return %arg0, %c0_i32 : i32, i32
  }
}

</mosaic_0001>

<llo_original>
// kernel: tpu_custom_call.1
$region0: #{tpu_custom_call.1}
  #allocation0 [shape = 'u32[]', space=smem, size = 0x4, offset = 0x4, fixed_abs, tag = 'smem constant byte address 0x4 - core index']
  #allocation1 [shape = 'u32[72,128]{1,0:T(1,128)}', space=vmem, size = 0x9000, scoped, tag = 'internal scratch']
  %s0 = inlined_call_operand.vmem [shape: s32[16,8], index: 0, kind: input, shape index: {}]
  %s1 = inlined_call_operand.vmem [shape: f32[16,8], index: 1, kind: input, shape index: {}]
  %s2 = inlined_call_operand.vmem [shape: bf16[64,128], index: 2, kind: input, shape index: {}]
  %s3 = inlined_call_operand.hbm [shape: bf16[128,128], index: 3, kind: input, shape index: {}]
  %s4 = inlined_call_operand.vmem [shape: f32[1,128], index: 4, kind: input, shape index: {}]
  %s5 = inlined_call_operand.hbm [shape: f32[16,128], index: 5, kind: output, shape index: {}]
  %s6 = sld [smem:[#allocation0]]
  $region57: #{tpu_custom_call.1} parent=0
    _
  %s8 = ssub.s32 1, %s6
  %s9 = scalar_select 0, %s8, %s6
  $region1: #{tpu_custom_call.1} parent=0
    #allocation2 [shape = 'u8[32768]{0}', space=vmem, size = 0x8000, scoped, tag = 'input window, operand 3, single buffered']
    #allocation3 [shape = 's32[2]{0}', space=sflag, size = 0x8, scoped, tag = 'scoped memory for tpu_custom_call.1']
    #allocation4 [shape = 's32[2]{0}', space=sflag, size = 0x8, scoped, tag = 'scoped memory for tpu_custom_call.1']
    #allocation5 [shape = 'u8[8192]{0}', space=vmem, size = 0x2000, scoped, tag = 'output window, operand 0']
    %10 = vsyncpa [#allocation3], 0
    %11 = vsyncpa [#allocation4], 0
    %s12 = scalar_lea.sflag [#allocation4], 1
    %13 = vsyncpa %s12, 0
    loop: start=0, step=1, limit=4
    $region2: #{tpu_custom_call.1} parent=1 // loop_pre_header
      _
    $region3: #{tpu_custom_call.1} parent=1 // loop_header
      %s15 = sphi 0, %s19
      %p16 = scmp.ge.s32.totalorder %s15, 4
      %s25 = sphi 0, %s27
      %s28 = sphi 0, %s25
      %s29 = sphi 0, %s28
      %s45 = sphi 0, %s29
      %s51 = sphi 0, %s53
      %s54 = sphi 0, %s51
      %s55 = sphi 0, %s54
      %s71 = sphi 0, %s55
      %s75 = sphi 0, %s75
      %s77 = sphi 0, %s75
      %s78 = sphi 0, %s77
      %s92 = sphi 0, %s78
      %s96 = sphi 0, %s96
      %s98 = sphi 0, %s96
      %s99 = sphi 0, %s98
      %s113 = sphi 0, %s99
      %s117 = sphi 0, %s117
      %s119 = sphi 0, %s117
      %s120 = sphi 0, %s119
      %s134 = sphi 0, %s120
      %s140 = sphi 0, %s142
      %s143 = sphi 0, %s140
      %s144 = sphi 0, %s143
      %s160 = sphi 0, %s144
    $region4: #{tpu_custom_call.1} parent=1 // loop_header_branch
      %18 = sbr.rel (%p16) target = $region8
    $region5: #{tpu_custom_call.1} parent=1 // loop_body
      %s20 = ssub.s32 %s15, 1
      %s21 = ssub.s32 %s15, 2
      %s22 = sadd.s32 %s15, 1
      %s23 = ssub.s32 %s15, %s22
      %p24 = scmp.eq.s32.totalorder %s23, 0
      %s26 = sadd.s32 %s25, 1
      %s27 = scalar_select %p24, %s25, %s26
      %p30 = pneg %p24
      %p31 = scmp.eq.s32.totalorder %s15, 1
      %p32 = por %p30, %p31
      %p33 = scmp.ne.s32.totalorder %s25, %s28
      %p34 = scmp.eq.s32.totalorder %s15, 0
      %p35 = por %p33, %p34
      %p36 = scmp.ne.s32.totalorder %s25, %s28
      %p37 = scmp.eq.s32.totalorder %s20, 1
      %p38 = por %p36, %p37
      %p39 = scmp.ne.s32.totalorder %s28, %s29
      %p40 = scmp.eq.s32.totalorder %s20, 0
      %p41 = por %p39, %p40
      %p42 = scmp.ne.s32.totalorder %s28, %s29
      %p43 = scmp.eq.s32.totalorder %s21, 1
      %p44 = por %p42, %p43
      %p46 = scmp.ne.s32.totalorder %s29, %s45
      %p47 = scmp.eq.s32.totalorder %s21, 0
      %p48 = por %p46, %p47
      %s49 = ssub.s32 %s15, %s22
      %p50 = scmp.eq.s32.totalorder %s49, 0
      %s52 = sadd.s32 %s51, 1
      %s53 = scalar_select %p50, %s51, %s52
      %p56 = pneg %p50
      %p57 = scmp.eq.s32.totalorder %s15, 1
      %p58 = por %p56, %p57
      %p59 = scmp.ne.s32.totalorder %s51, %s54
      %p60 = scmp.eq.s32.totalorder %s15, 0
      %p61 = por %p59, %p60
      %p62 = scmp.ne.s32.totalorder %s51, %s54
      %p63 = scmp.eq.s32.totalorder %s20, 1
      %p64 = por %p62, %p63
      %p65 = scmp.ne.s32.totalorder %s54, %s55
      %p66 = scmp.eq.s32.totalorder %s20, 0
      %p67 = por %p65, %p66
      %p68 = scmp.ne.s32.totalorder %s54, %s55
      %p69 = scmp.eq.s32.totalorder %s21, 1
      %p70 = por %p68, %p69
      %p72 = scmp.ne.s32.totalorder %s55, %s71
      %p73 = scmp.eq.s32.totalorder %s21, 0
      %p74 = por %p72, %p73
      %s76 = sadd.s32 %s75, 1
      %p79 = scmp.eq.s32.totalorder %s15, 1
      %p80 = scmp.ne.s32.totalorder %s75, %s77
      %p81 = scmp.eq.s32.totalorder %s15, 0
      %p82 = por %p80, %p81
      %p83 = scmp.ne.s32.totalorder %s75, %s77
      %p84 = scmp.eq.s32.totalorder %s20, 1
      %p85 = por %p83, %p84
      %p86 = scmp.ne.s32.totalorder %s77, %s78
      %p87 = scmp.eq.s32.totalorder %s20, 0
      %p88 = por %p86, %p87
      %p89 = scmp.ne.s32.totalorder %s77, %s78
      %p90 = scmp.eq.s32.totalorder %s21, 1
      %p91 = por %p89, %p90
      %p93 = scmp.ne.s32.totalorder %s78, %s92
      %p94 = scmp.eq.s32.totalorder %s21, 0
      %p95 = por %p93, %p94
      %s97 = sadd.s32 %s96, 1
      %p100 = scmp.eq.s32.totalorder %s15, 1
      %p101 = scmp.ne.s32.totalorder %s96, %s98
      %p102 = scmp.eq.s32.totalorder %s15, 0
      %p103 = por %p101, %p102
      %p104 = scmp.ne.s32.totalorder %s96, %s98
      %p105 = scmp.eq.s32.totalorder %s20, 1
      %p106 = por %p104, %p105
      %p107 = scmp.ne.s32.totalorder %s98, %s99
      %p108 = scmp.eq.s32.totalorder %s20, 0
      %p109 = por %p107, %p108
      %p110 = scmp.ne.s32.totalorder %s98, %s99
      %p111 = scmp.eq.s32.totalorder %s21, 1
      %p112 = por %p110, %p111
      %p114 = scmp.ne.s32.totalorder %s99, %s113
      %p115 = scmp.eq.s32.totalorder %s21, 0
      %p116 = por %p114, %p115
      %s118 = sadd.s32 %s117, 1
      %p121 = scmp.eq.s32.totalorder %s15, 1
      %p122 = scmp.ne.s32.totalorder %s117, %s119
      %p123 = scmp.eq.s32.totalorder %s15, 0
      %p124 = por %p122, %p123
      %p125 = scmp.ne.s32.totalorder %s117, %s119
      %p126 = scmp.eq.s32.totalorder %s20, 1
      %p127 = por %p125, %p126
      %p128 = scmp.ne.s32.totalorder %s119, %s120
      %p129 = scmp.eq.s32.totalorder %s20, 0
      %p130 = por %p128, %p129
      %p131 = scmp.ne.s32.totalorder %s119, %s120
      %p132 = scmp.eq.s32.totalorder %s21, 1
      %p133 = por %p131, %p132
      %p135 = scmp.ne.s32.totalorder %s120, %s134
      %p136 = scmp.eq.s32.totalorder %s21, 0
      %p137 = por %p135, %p136
      %s138 = ssub.s32 %s15, %s22
      %p139 = scmp.eq.s32.totalorder %s138, 0
      %s141 = sadd.s32 %s140, 1
      %s142 = scalar_select %p139, %s140, %s141
      %p145 = pneg %p139
      %p146 = scmp.eq.s32.totalorder %s15, 1
      %p147 = por %p145, %p146
      %p148 = scmp.ne.s32.totalorder %s140, %s143
      %p149 = scmp.eq.s32.totalorder %s15, 0
      %p150 = por %p148, %p149
      %p151 = scmp.ne.s32.totalorder %s140, %s143
      %p152 = scmp.eq.s32.totalorder %s20, 1
      %p153 = por %p151, %p152
      %p154 = scmp.ne.s32.totalorder %s143, %s144
      %p155 = scmp.eq.s32.totalorder %s20, 0
      %p156 = por %p154, %p155
      %p157 = scmp.ne.s32.totalorder %s143, %s144
      %p158 = scmp.eq.s32.totalorder %s21, 1
      %p159 = por %p157, %p158
      %p161 = scmp.ne.s32.totalorder %s144, %s160
      %p162 = scmp.eq.s32.totalorder %s21, 0
      %p163 = por %p161, %p162
      %p164 = scmp.le.s32.totalorder 1, %s15
      %p165 = scmp.lt.s32.totalorder %s15, 3
      %p166 = pnand %p164, %p165
      %p167 = pneg %p166
      // Predicated region
      $region9: #{tpu_custom_call.1} parent=5 // pred_check
        _
      $region10: #{tpu_custom_call.1} parent=5 // pred_check_branch
        %169 = sbr.rel (%p166) target = $region12
      $region11: #{tpu_custom_call.1} parent=5 // pred_region
        %s170 = ssub.s32 %s15, 1
        // Predicated region
        $region13: #{tpu_custom_call.1} parent=11 // pred_check
          %p171 = pneg %p88
        $region14: #{tpu_custom_call.1} parent=11 // pred_check_branch
          %173 = sbr.rel (%p171) target = $region16
        $region15: #{tpu_custom_call.1} parent=11 // pred_region
          _
        $region16: #{tpu_custom_call.1} parent=11 // pred_fallthru
          _
        // Predicated region
        $region17: #{tpu_custom_call.1} parent=11 // pred_check
          %p174 = pneg %p109
        $region18: #{tpu_custom_call.1} parent=11 // pred_check_branch
          %176 = sbr.rel (%p174) target = $region20
        $region19: #{tpu_custom_call.1} parent=11 // pred_region
          %178 = vsyncadd [#allocation3], 0
          %s179 = sshll.u32 %s3, 4
          %s180 = int_to_ptr.hbm [resolvable:$true] %s179
          %s181 = sshll.u32 [#allocation2], 4
          %s182 = int_to_ptr.vmem [resolvable:$true] %s181
          %187 = dma.hbm_to_vmem [thread:$0]  %s180, 1024, %s182, [#allocation3], 64, 64, 4
        $region20: #{tpu_custom_call.1} parent=11 // pred_fallthru
          _
        // Predicated region
        $region21: #{tpu_custom_call.1} parent=11 // pred_check
          %p188 = pneg %p130
        $region22: #{tpu_custom_call.1} parent=11 // pred_check_branch
          %190 = sbr.rel (%p188) target = $region24
        $region23: #{tpu_custom_call.1} parent=11 // pred_region
          _
        $region24: #{tpu_custom_call.1} parent=11 // pred_fallthru
          _
      $region12: #{tpu_custom_call.1} parent=5 // pred_fallthru
        _
      %p191 = scmp.lt.s32.totalorder %s15, 2
      // Predicated region
      $region25: #{tpu_custom_call.1} parent=5 // pred_check
        %p192 = pneg %p191
      $region26: #{tpu_custom_call.1} parent=5 // pred_check_branch
        %194 = sbr.rel (%p192) target = $region28
      $region27: #{tpu_custom_call.1} parent=5 // pred_region
        // Predicated region
        $region29: #{tpu_custom_call.1} parent=27 // pred_check
          %p195 = pneg %p35
        $region30: #{tpu_custom_call.1} parent=27 // pred_check_branch
          %197 = sbr.rel (%p195) target = $region32
        $region31: #{tpu_custom_call.1} parent=27 // pred_region
          %p198 = scmp.lt.s32.totalorder %s15, 1
          %s199 = scalar_select %p198, %s15, 1
          %s200 = smul.addr %s199, 8
          %s201 = scalar_lea.vmem %s0, %s200
        $region32: #{tpu_custom_call.1} parent=27 // pred_fallthru
          _
        // Predicated region
        $region33: #{tpu_custom_call.1} parent=27 // pred_check
          %p202 = pneg %p61
        $region34: #{tpu_custom_call.1} parent=27 // pred_check_branch
          %204 = sbr.rel (%p202) target = $region36
        $region35: #{tpu_custom_call.1} parent=27 // pred_region
          %p205 = scmp.lt.s32.totalorder %s15, 1
          %s206 = scalar_select %p205, %s15, 1
          %s207 = smul.addr %s206, 8
          %s208 = scalar_lea.vmem %s1, %s207
        $region36: #{tpu_custom_call.1} parent=27 // pred_fallthru
          _
      $region28: #{tpu_custom_call.1} parent=5 // pred_fallthru
        _
      %p209 = scmp.le.s32.totalorder 1, %s15
      %p210 = scmp.lt.s32.totalorder %s15, 3
      %p211 = pnand %p209, %p210
      %p212 = pneg %p211
      // Predicated region
      $region37: #{tpu_custom_call.1} parent=5 // pred_check
        _
      $region38: #{tpu_custom_call.1} parent=5 // pred_check_branch
        %214 = sbr.rel (%p211) target = $region40
      $region39: #{tpu_custom_call.1} parent=5 // pred_region
        %s215 = ssub.s32 %s15, 1
        // Predicated region
        $region41: #{tpu_custom_call.1} parent=39 // pred_check
          %p216 = pneg %p109
        $region42: #{tpu_custom_call.1} parent=39 // pred_check_branch
          %218 = sbr.rel (%p216) target = $region44
        $region43: #{tpu_custom_call.1} parent=39 // pred_region
          %220 = dma.done [#allocation3], 1024
        $region44: #{tpu_custom_call.1} parent=39 // pred_fallthru
          _
        %p221 = scmp.lt.s32.totalorder %s20, 1
        %s222 = scalar_select %p221, %s20, 1
        %s223 = smul.addr %s222, 8
        %s224 = scalar_lea.vmem %s0, %s223
        %p225 = pneg %p41
        %p226 = pneg %p38
        %p227 = scmp.lt.s32.totalorder %s20, 1
        %s228 = scalar_select %p227, %s20, 1
        %s229 = smul.addr %s228, 8
        %s230 = scalar_lea.vmem %s1, %s229
        %p231 = pneg %p67
        %p232 = pneg %p64
        %p233 = pneg %p88
        %p234 = pneg %p85
        %p235 = pneg %p109
        %p236 = pneg %p106
        %p237 = pneg %p130
        %p238 = pneg %p127
        %p239 = pneg %p156
        %p240 = pneg %p153
        %s241 = sand.u32 %s143, 1
        %s242 = scalar_lea.sflag [#allocation4], %s241
        %s243 = sand.u32 %s143, 1
        %s244 = smul.addr %s243, 8
        %s245 = scalar_lea.vmem [#allocation5], %s244
        %p246 = scmp.lt.s32.totalorder %s20, 1
        %s247 = scalar_select %p246, %s20, 1
        %s248 = smul.addr %s247, 8
        %s249 = scalar_lea.vmem %s0, %s248
        %p250 = scmp.lt.s32.totalorder %s20, 1
        %s251 = scalar_select %p250, %s20, 1
        %s252 = smul.addr %s251, 8
        %s253 = scalar_lea.vmem %s1, %s252
        %v255 = vld [vmem:[%s249] sm:$0xff]
        %v256 = vld [vmem:[%s253] sm:$0xff]
        %vm257 = vcmask 64512
        %v258 = vsel %vm257, %v256, 0.0
        %259 = vadd.xlane.f32.xlu0 %v258
        %v260 = vpop.xlane.xlu0 %259
        %v261 = vmax.f32 %v260, 1.0
        %v262 = vrcp.pop %v261
        %v263 = vmul.f32 %v261, %v262
        %v264 = vsub.f32 1.0, %v263
        %v265 = vmul.f32 %v262, %v264
        %v266 = vadd.f32 %v262, %v265
        %vm267 = vweird.f32 %v261
        %vm268 = vweird.f32 %v262
        %vm269 = vmor %vm267, %vm268
        %v270 = vsel %vm269, %v262, %v266
        %v271 = vand.u32 2147483647, %v261
        %vm272 = vcmp.eq.f32.partialorder %v271, 8.507059e+37
        %v273 = vand.u32 %v261, 2147483648
        %v274 = vor.u32 1.1754944e-38, %v273
        %v275 = vsel %vm272, %v274, %v270
        %v276 = vmul.f32 %v256, %v275
        %v277 = vlaneseq
        %v278 = vand.u32 %v277, 127
        %279 = vset.pattern.permute.xlu0 0
        %280 = vperm.xlu0 %279, %v255
        %v281 = vpop.permute.xlu0 %280
        %vm282 = vcmp.eq.s32.totalorder %v281, %v278
        %284 = vset.pattern.permute.xlu0 0
        %285 = vperm.xlu0 %284, %v276
        %v286 = vpop.permute.xlu0 %285
        %v288 = vsel %vm282, %v286, 0.0
        %v289 = vadd.f32 %v288, 0.0
        %290 = vset.pattern.permute.xlu0 1
        %291 = vperm.xlu0 %290, %v255
        %v292 = vpop.permute.xlu0 %291
        %vm293 = vcmp.eq.s32.totalorder %v292, %v278
        %294 = vset.pattern.permute.xlu0 1
        %295 = vperm.xlu0 %294, %v276
        %v296 = vpop.permute.xlu0 %295
        %v298 = vsel %vm293, %v296, 0.0
        %v299 = vadd.f32 %v289, %v298
        %300 = vset.pattern.permute.xlu0 2
        %301 = vperm.xlu0 %300, %v255
        %v302 = vpop.permute.xlu0 %301
        %vm303 = vcmp.eq.s32.totalorder %v302, %v278
        %304 = vset.pattern.permute.xlu0 2
        %305 = vperm.xlu0 %304, %v276
        %v306 = vpop.permute.xlu0 %305
        %v308 = vsel %vm303, %v306, 0.0
        %v309 = vadd.f32 %v299, %v308
        %310 = vset.pattern.permute.xlu0 3
        %311 = vperm.xlu0 %310, %v255
        %v312 = vpop.permute.xlu0 %311
        %vm313 = vcmp.eq.s32.totalorder %v312, %v278
        %314 = vset.pattern.permute.xlu0 3
        %315 = vperm.xlu0 %314, %v276
        %v316 = vpop.permute.xlu0 %315
        %v318 = vsel %vm313, %v316, 0.0
        %v319 = vadd.f32 %v309, %v318
        %320 = vset.pattern.permute.xlu0 4
        %321 = vperm.xlu0 %320, %v255
        %v322 = vpop.permute.xlu0 %321
        %vm323 = vcmp.eq.s32.totalorder %v322, %v278
        %324 = vset.pattern.permute.xlu0 4
        %325 = vperm.xlu0 %324, %v276
        %v326 = vpop.permute.xlu0 %325
        %v328 = vsel %vm323, %v326, 0.0
        %v329 = vadd.f32 %v319, %v328
        %330 = vset.pattern.permute.xlu0 5
        %331 = vperm.xlu0 %330, %v255
        %v332 = vpop.permute.xlu0 %331
        %vm333 = vcmp.eq.s32.totalorder %v332, %v278
        %334 = vset.pattern.permute.xlu0 5
        %335 = vperm.xlu0 %334, %v276
        %v336 = vpop.permute.xlu0 %335
        %v338 = vsel %vm333, %v336, 0.0
        %v339 = vadd.f32 %v329, %v338
        %340 = vset.pattern.permute.xlu0 6
        %341 = vperm.xlu0 %340, %v255
        %v342 = vpop.permute.xlu0 %341
        %vm343 = vcmp.eq.s32.totalorder %v342, %v278
        %344 = vset.pattern.permute.xlu0 6
        %345 = vperm.xlu0 %344, %v276
        %v346 = vpop.permute.xlu0 %345
        %v348 = vsel %vm343, %v346, 0.0
        %v349 = vadd.f32 %v339, %v348
        %350 = vset.pattern.permute.xlu0 7
        %351 = vperm.xlu0 %350, %v255
        %v352 = vpop.permute.xlu0 %351
        %vm353 = vcmp.eq.s32.totalorder %v352, %v278
        %354 = vset.pattern.permute.xlu0 7
        %355 = vperm.xlu0 %354, %v276
        %v356 = vpop.permute.xlu0 %355
        %v358 = vsel %vm353, %v356, 0.0
        %v359 = vadd.f32 %v349, %v358
        %v360 = vpack.c.bf16 %v359, %v359
        %v361 = vld [vmem:[%s2] sm:$0xf]
        %v362 = vld [vmem:[%s2 + $0x4] sm:$0xf]
        %v363 = vld [vmem:[%s2 + $0x8] sm:$0xf]
        %v364 = vld [vmem:[%s2 + $0xc] sm:$0xf]
        %v365 = vld [vmem:[%s2 + $0x10] sm:$0xf]
        %v366 = vld [vmem:[%s2 + $0x14] sm:$0xf]
        %v367 = vld [vmem:[%s2 + $0x18] sm:$0xf]
        %v368 = vld [vmem:[%s2 + $0x1c] sm:$0xf]
        %v377 = vunpack.c.l.b16 %v361
        %v378 = vunpack.c.l.b16 %v362
        %v379 = vunpack.c.l.b16 %v363
        %v380 = vunpack.c.l.b16 %v364
        %v381 = vunpack.c.l.b16 %v365
        %v382 = vunpack.c.l.b16 %v366
        %v383 = vunpack.c.l.b16 %v367
        %v384 = vunpack.c.l.b16 %v368
        %v385 = vpack.c.b16 %v378, %v377
        %v386 = vpack.c.b16 %v380, %v379
        %v387 = vpack.c.b16 %v382, %v381
        %v388 = vpack.c.b16 %v384, %v383
        %vm393 = vcmask 523264
        %v395 = vsel %vm393, %v360, 0
        %397 = vmatpush.bf16.msra.mxu0 0
        %398 = vmatpush.bf16.msra.mxu0 0
        %399 = vmatpush.bf16.msra.mxu0 0
        %400 = vmatpush.bf16.msra.mxu0 0
        %401 = vmatpush.bf16.msra.mxu0 %v388
        %402 = vmatpush.bf16.msra.mxu0 %v387
        %403 = vmatpush.bf16.msra.mxu0 %v386
        %404 = vmatpush.bf16.msra.mxu0 %v385
        %405 = vmatmul.bf16.gmra.mxu0 %v395
        %v406 = vpop.f32.mrf.mxu0
        %v407 = vadd.f32 0.0, %v406
        %v408 = vpop.f32.mrf.mxu0
        %409 = vdwg.mxu0
        %v410 = vpack.c.bf16 %v407, %v407
        %v411 = vld [vmem:[#allocation2] sm:$0xf]
        %v412 = vld [vmem:[#allocation2 + $0x4] sm:$0xf]
        %v413 = vld [vmem:[#allocation2 + $0x8] sm:$0xf]
        %v414 = vld [vmem:[#allocation2 + $0xc] sm:$0xf]
        %v415 = vld [vmem:[#allocation2 + $0x10] sm:$0xf]
        %v416 = vld [vmem:[#allocation2 + $0x14] sm:$0xf]
        %v417 = vld [vmem:[#allocation2 + $0x18] sm:$0xf]
        %v418 = vld [vmem:[#allocation2 + $0x1c] sm:$0xf]
        %v419 = vld [vmem:[#allocation2 + $0x20] sm:$0xf]
        %v420 = vld [vmem:[#allocation2 + $0x24] sm:$0xf]
        %v421 = vld [vmem:[#allocation2 + $0x28] sm:$0xf]
        %v422 = vld [vmem:[#allocation2 + $0x2c] sm:$0xf]
        %v423 = vld [vmem:[#allocation2 + $0x30] sm:$0xf]
        %v424 = vld [vmem:[#allocation2 + $0x34] sm:$0xf]
        %v425 = vld [vmem:[#allocation2 + $0x38] sm:$0xf]
        %v426 = vld [vmem:[#allocation2 + $0x3c] sm:$0xf]
        %v427 = vld [vmem:[%s4] sm:$0x1]
        %v429 = vperm.slane %v427, 0
        %v447 = vunpack.c.l.b16 %v411
        %v448 = vunpack.c.l.b16 %v412
        %v449 = vunpack.c.l.b16 %v413
        %v450 = vunpack.c.l.b16 %v414
        %v451 = vunpack.c.l.b16 %v415
        %v452 = vunpack.c.l.b16 %v416
        %v453 = vunpack.c.l.b16 %v417
        %v454 = vunpack.c.l.b16 %v418
        %v455 = vunpack.c.l.b16 %v419
        %v456 = vunpack.c.l.b16 %v420
        %v457 = vunpack.c.l.b16 %v421
        %v458 = vunpack.c.l.b16 %v422
        %v459 = vunpack.c.l.b16 %v423
        %v460 = vunpack.c.l.b16 %v424
        %v461 = vunpack.c.l.b16 %v425
        %v462 = vunpack.c.l.b16 %v426
        %v463 = vpack.c.b16 %v448, %v447
        %v464 = vpack.c.b16 %v450, %v449
        %v465 = vpack.c.b16 %v452, %v451
        %v466 = vpack.c.b16 %v454, %v453
        %v467 = vpack.c.b16 %v456, %v455
        %v468 = vpack.c.b16 %v458, %v457
        %v469 = vpack.c.b16 %v460, %v459
        %v470 = vpack.c.b16 %v462, %v461
        %479 = vmatpush.bf16.msra.mxu0 %v470
        %480 = vmatpush.bf16.msra.mxu0 %v469
        %481 = vmatpush.bf16.msra.mxu0 %v468
        %482 = vmatpush.bf16.msra.mxu0 %v467
        %483 = vmatpush.bf16.msra.mxu0 %v466
        %484 = vmatpush.bf16.msra.mxu0 %v465
        %485 = vmatpush.bf16.msra.mxu0 %v464
        %486 = vmatpush.bf16.msra.mxu0 %v463
        %487 = vmatmul.bf16.gmra.mxu0 %v410
        %v488 = vpop.f32.mrf.mxu0
        %v489 = vadd.f32 %v429, %v488
        %v490 = vpop.f32.mrf.mxu0
        %491 = vdwg.mxu0
        %v492 = vtanh.pop %v489
        %493 = vst [vmem:[%s245] sm:$0xff] %v492
        %s494 = sand.u32 %s143, 1
        %s495 = scalar_lea.sflag [#allocation4], %s494
        %s496 = sand.u32 %s143, 1
        %s497 = smul.addr %s496, 8
        %s498 = scalar_lea.vmem [#allocation5], %s497
        // Predicated region
        $region45: #{tpu_custom_call.1} parent=39 // pred_check
          %p499 = pneg %p153
        $region46: #{tpu_custom_call.1} parent=39 // pred_check_branch
          %501 = sbr.rel (%p499) target = $region48
        $region47: #{tpu_custom_call.1} parent=39 // pred_region
          %503 = vsyncadd %s495, 0
          %s504 = smul.addr %s20, 8
          %s505 = scalar_lea.hbm %s5, %s504
          %s507 = sshll.u32 %s498, 4
          %s508 = int_to_ptr.vmem [resolvable:$true] %s507
          %s509 = sshll.u32 %s505, 4
          %s510 = int_to_ptr.hbm [resolvable:$true] %s509
          %512 = dma.vmem_to_hbm [thread:$0]  %s508, 128, %s510, %s495
        $region48: #{tpu_custom_call.1} parent=39 // pred_fallthru
          _
      $region40: #{tpu_custom_call.1} parent=5 // pred_fallthru
        _
      %p513 = scmp.le.s32.totalorder 2, %s15
      // Predicated region
      $region49: #{tpu_custom_call.1} parent=5 // pred_check
        %p514 = pneg %p513
      $region50: #{tpu_custom_call.1} parent=5 // pred_check_branch
        %516 = sbr.rel (%p514) target = $region52
      $region51: #{tpu_custom_call.1} parent=5 // pred_region
        %s517 = ssub.s32 %s15, 2
        // Predicated region
        $region53: #{tpu_custom_call.1} parent=51 // pred_check
          %p518 = pneg %p159
        $region54: #{tpu_custom_call.1} parent=51 // pred_check_branch
          %520 = sbr.rel (%p518) target = $region56
        $region55: #{tpu_custom_call.1} parent=51 // pred_region
          %s521 = sand.u32 %s144, 1
          %s522 = scalar_lea.sflag [#allocation4], %s521
          %s523 = sand.u32 %s144, 1
          %s524 = smul.addr %s523, 8
          %s525 = scalar_lea.vmem [#allocation5], %s524
          %527 = dma.done %s522, 128
        $region56: #{tpu_custom_call.1} parent=51 // pred_fallthru
          _
      $region52: #{tpu_custom_call.1} parent=5 // pred_fallthru
        _
    $region6: #{tpu_custom_call.1} parent=1 // loop_footer
      %s19 = sadd.s32 1, %s15
    $region7: #{tpu_custom_call.1} parent=1 // loop_footer_branch
      %14 = sbr.rel target = $region3
    $region8: #{tpu_custom_call.1} parent=1 // loop_exit
      _
    %528 = vsyncpa [#allocation3], 1
    %s529 = scalar_lea.sflag [#allocation3], 1
    %530 = vsyncpa %s529, 1
    %531 = vsyncpa [#allocation4], 1
    %s532 = scalar_lea.sflag [#allocation4], 1
    %533 = vsyncpa %s532, 1

</llo_original>
